<compile_context>
chip_gen: v7x
topology: tpu7x:2x2x1
jax: 0.10.0
libtpu: 0.0.40
codegen_flags: <defaults>
</compile_context>

<pallas_src>
import functools

import jax
import jax.numpy as jnp
import numpy as np
from jax.experimental import pallas as pl
from jax.experimental.pallas import tpu as pltpu


def _wbce_kernel(label_ref, logit_ref, out_ref, *, n_old_classes, ignore_index):
    x = logit_ref[...].astype(jnp.float32)     # (C, TILE_P)
    lab = label_ref[...].astype(jnp.int32)     # (1, TILE_P), broadcasts over C

    # Global class id per sublane row (channel c -> c + n_old_classes).
    cls = jax.lax.broadcasted_iota(jnp.int32, x.shape, 0) + n_old_classes
    # The PyTorch loop skips cls_idx in {0, ignore_index}.
    valid = jnp.logical_and(cls != 0, cls != ignore_index)
    hit = jnp.logical_and(valid, lab == cls)   # target == 1.0 exactly here

    # Numerically-stable BCEWithLogits (pos_weight=None, reduction='none'),
    # with the x*target term folded into a select (no target materialization).
    # TODO(synk): pos_weight tensor (nn.BCEWithLogitsLoss pos_weight) not
    # implemented; only the default pos_weight=None path is supported.
    loss = (jnp.maximum(x, 0.0)
            + jnp.log1p(jnp.exp(-jnp.abs(x)))
            - jnp.where(hit, x, 0.0))
    out_ref[...] = loss


def _round_up(x, m):
    return ((x + m - 1) // m) * m


def _choose_tile_p(C, HW, vmem_budget_bytes=16 * 1024 * 1024, max_tile=16384):
    """Largest lane-tile (multiple of 128) fitting a double-buffered VMEM budget.

    Accounts for VMEM sublane padding: the (C, tile) logit/out tiles occupy
    round_up(C, 8) sublanes and the (1, tile) label tile occupies 8.  Budget
    counts 2 buffers per array, f32 (conservative if logits are bf16).  16 MiB
    stays well inside every chip's scoped-VMEM default (v5e/v6e/v7x).
    """
    c_pad = _round_up(max(int(C), 1), 8)
    per_lane_bytes = 2 * 4 * (2 * c_pad + 8)   # 2 bufs x f32 x (logit + out + label)
    tile = vmem_budget_bytes // per_lane_bytes
    tile = min(tile, max_tile, _round_up(HW, 128))
    tile = max(128, (tile // 128) * 128)
    return int(tile)


def wbce_loss(logit, label, *, n_old_classes, ignore_index=255,
              reduction="none", tile_p=None):
    """logit: (N, C, H, W) float; label: (N, H, W) int.

    Returns the elementwise BCEWithLogits loss, shape (N, C, H, W), float32
    (reduction='none'), or its scalar mean (reduction='mean').
    """
    N, C, H, W = logit.shape
    HW = H * W

    if tile_p is None:
        tile_p = _choose_tile_p(C, HW)
    tile_p = int(tile_p)
    if tile_p >= HW:
        # Full-extent lane tile: legal for any HW (block dim == array dim),
        # no padding, no partial blocks.
        tile_p = HW
    else:
        # Multiple-of-128 tile; pl.cdiv grid handles a masked partial final block.
        tile_p = max(128, (tile_p // 128) * 128)

    # Free reshapes on the native NCHW layout — no transposes, no copies.
    x = logit.reshape(N, C, HW)               # keep native dtype (f32 or bf16)
    lab = label.reshape(N, 1, HW)             # keep native integer dtype

    grid = (N, pl.cdiv(HW, tile_p))
    kernel = functools.partial(_wbce_kernel,
                               n_old_classes=int(n_old_classes),
                               ignore_index=int(ignore_index))

    out = pl.pallas_call(
        kernel,
        out_shape=jax.ShapeDtypeStruct((N, C, HW), jnp.float32),
        grid=grid,
        in_specs=[
            pl.BlockSpec((pl.Squeezed(), 1, tile_p), lambda n, i: (n, 0, i)),  # label
            pl.BlockSpec((pl.Squeezed(), C, tile_p), lambda n, i: (n, 0, i)),  # logit
        ],
        out_specs=pl.BlockSpec((pl.Squeezed(), C, tile_p), lambda n, i: (n, 0, i)),
        compiler_params=pltpu.CompilerParams(
            dimension_semantics=("parallel", "parallel")),
    )(lab, x)

    out = out.reshape(N, C, H, W)

    if reduction == "none":
        return out
    elif reduction == "mean":
        return jnp.mean(out)
    else:
        raise NotImplementedError(reduction)


def _reference(logit, label, *, n_old_classes, ignore_index=255):
    """Pure-JAX mirror of the PyTorch WBCELoss forward (reduction='none')."""
    N, C, H, W = logit.shape
    x = logit.astype(jnp.float32)
    cls = (jnp.arange(C, dtype=jnp.int32) + n_old_classes).reshape(1, C, 1, 1)
    valid = jnp.logical_and(cls != 0, cls != ignore_index)
    target = jnp.where(
        jnp.logical_and(valid, label[:, None, :, :].astype(jnp.int32) == cls),
        1.0, 0.0).astype(jnp.float32)
    return (jnp.maximum(x, 0.0) - x * target
            + jnp.log1p(jnp.exp(-jnp.abs(x))))


if __name__ == "__main__":
    key = jax.random.PRNGKey(0)

    def _make_case(k, N, C, H, W, n_old_classes, ignore_index):
        k1, k2, k3 = jax.random.split(k, 3)
        logit = jax.random.normal(k1, (N, C, H, W), dtype=jnp.float32)
        # Valid global class ids: 0 .. n_old_classes + C - 1, plus ignore_index.
        label = jax.random.randint(k2, (N, H, W), 0, n_old_classes + C,
                                   dtype=jnp.int32)
        ign = jax.random.bernoulli(k3, 0.1, (N, H, W))
        label = jnp.where(ign, jnp.int32(ignore_index), label)
        return logit, label

    cases = [
        # (N, C, H, W, n_old, ignore, tile_p) — primary small case (lane-aligned HW)
        dict(N=2, C=4, H=16, W=16, n_old_classes=3, ignore_index=255, tile_p=None),
        # HW = 320 (not a multiple of 128) -> full-extent lane tile, cls==0 skip path
        dict(N=2, C=4, H=16, W=20, n_old_classes=0, ignore_index=255, tile_p=None),
        # HW = 2304 with forced tile_p=512 -> multi-tile grid with partial final block
        dict(N=1, C=4, H=48, W=48, n_old_classes=5, ignore_index=255, tile_p=512),
    ]

    for cfg in cases:
        key, sub = jax.random.split(key)
        logit, label = _make_case(sub, cfg["N"], cfg["C"], cfg["H"], cfg["W"],
                                  cfg["n_old_classes"], cfg["ignore_index"])
        loss = wbce_loss(logit, label,
                         n_old_classes=cfg["n_old_classes"],
                         ignore_index=cfg["ignore_index"],
                         tile_p=cfg["tile_p"])
        jax.block_until_ready(loss)
        ref = _reference(logit, label,
                         n_old_classes=cfg["n_old_classes"],
                         ignore_index=cfg["ignore_index"])
        np.testing.assert_allclose(np.asarray(loss), np.asarray(ref),
                                   rtol=1e-5, atol=1e-5)
        assert loss.shape == (cfg["N"], cfg["C"], cfg["H"], cfg["W"])

    print("KERNEL_OK")
</pallas_src>

<mosaic_0001>
module attributes {stable_mosaic.version = 11 : i64} {
  func.func @_wbce_kernel(%arg0: i32, %arg1: i32, %arg2: memref<1x1x256xi32, #tpu.memory_space<vmem>>, %arg3: memref<1x4x256xf32, #tpu.memory_space<vmem>>, %arg4: memref<1x4x256xf32, #tpu.memory_space<vmem>>) attributes {dimension_semantics = [#tpu.dimension_semantics<parallel>, #tpu.dimension_semantics<parallel>], iteration_bounds = array<i64: 2, 1>, scalar_prefetch = 0 : i64, scratch_operands = 0 : i64, tpu.core_type = #tpu.core_type<tc>, window_params = [{transform_indices = @transform_0, window_bounds = array<i64: 1, 1, 256>}, {transform_indices = @transform_1, window_bounds = array<i64: 1, 4, 256>}, {transform_indices = @transform_2, window_bounds = array<i64: 1, 4, 256>}]} {
    %c0 = arith.constant 0 : index
    %c0_0 = arith.constant 0 : index
    %c0_1 = arith.constant 0 : index
    %0 = vector.load %arg3[%c0, %c0_0, %c0_1] : memref<1x4x256xf32, #tpu.memory_space<vmem>>, vector<1x4x256xf32>
    %1 = vector.shape_cast %0 : vector<1x4x256xf32> to vector<4x256xf32>
    %c0_2 = arith.constant 0 : index
    %c0_3 = arith.constant 0 : index
    %c0_4 = arith.constant 0 : index
    %2 = vector.load %arg2[%c0_2, %c0_3, %c0_4] : memref<1x1x256xi32, #tpu.memory_space<vmem>>, vector<1x1x256xi32>
    %3 = vector.shape_cast %2 : vector<1x1x256xi32> to vector<1x256xi32>
    %4 = tpu.iota {dimensions = array<i32: 0>} : vector<4x256xi32>
    %c3_i32 = arith.constant 3 : i32
    %5 = vector.broadcast %c3_i32 : i32 to vector<4x256xi32>
    %6 = arith.addi %4, %5 : vector<4x256xi32>
    %c0_i32 = arith.constant 0 : i32
    %7 = vector.broadcast %c0_i32 : i32 to vector<4x256xi32>
    %8 = arith.cmpi ne, %6, %7 : vector<4x256xi32>
    %c255_i32 = arith.constant 255 : i32
    %9 = vector.broadcast %c255_i32 : i32 to vector<4x256xi32>
    %10 = arith.cmpi ne, %6, %9 : vector<4x256xi32>
    %11 = arith.andi %8, %10 : vector<4x256xi1>
    %12 = vector.broadcast %3 : vector<1x256xi32> to vector<4x256xi32>
    %13 = arith.cmpi eq, %12, %6 : vector<4x256xi32>
    %14 = arith.andi %11, %13 : vector<4x256xi1>
    %cst = arith.constant 0.000000e+00 : f32
    %15 = vector.broadcast %cst : f32 to vector<4x256xf32>
    %16 = arith.maximumf %1, %15 : vector<4x256xf32>
    %17 = math.absf %1 : vector<4x256xf32>
    %cst_5 = arith.constant 0.000000e+00 : f32
    %18 = vector.broadcast %cst_5 : f32 to vector<4x256xf32>
    %19 = arith.subf %18, %17 : vector<4x256xf32>
    %20 = math.exp %19 : vector<4x256xf32>
    %21 = math.log1p %20 : vector<4x256xf32>
    %22 = arith.addf %16, %21 : vector<4x256xf32>
    %cst_6 = arith.constant 0.000000e+00 : f32
    %23 = vector.broadcast %cst_6 : f32 to vector<4x256xf32>
    %24 = arith.select %14, %1, %23 : vector<4x256xi1>, vector<4x256xf32>
    %25 = arith.subf %22, %24 : vector<4x256xf32>
    %c0_7 = arith.constant 0 : index
    %c0_8 = arith.constant 0 : index
    %c0_9 = arith.constant 0 : index
    %26 = vector.load %arg4[%c0_7, %c0_8, %c0_9] : memref<1x4x256xf32, #tpu.memory_space<vmem>>, vector<1x4x256xf32>
    %27 = vector.shape_cast %26 : vector<1x4x256xf32> to vector<4x256xf32>
    %28 = vector.shape_cast %25 : vector<4x256xf32> to vector<1x4x256xf32>
    tpu.vector_store %arg4[%c0_7, %c0_8, %c0_9], %28 {strides = array<i32>} : memref<1x4x256xf32, #tpu.memory_space<vmem>>, vector<1x4x256xf32>,
    return
  }
  func.func @transform_0(%arg0: i32, %arg1: i32) -> (i32, i32, i32) {
    %c0_i32 = arith.constant 0 : i32
    %c0_i32_0 = arith.constant 0 : i32
    return %arg0, %c0_i32, %arg1 : i32, i32, i32
  }
  func.func @transform_1(%arg0: i32, %arg1: i32) -> (i32, i32, i32) {
    %c0_i32 = arith.constant 0 : i32
    %c0_i32_0 = arith.constant 0 : i32
    return %arg0, %c0_i32, %arg1 : i32, i32, i32
  }
  func.func @transform_2(%arg0: i32, %arg1: i32) -> (i32, i32, i32) {
    %c0_i32 = arith.constant 0 : i32
    %c0_i32_0 = arith.constant 0 : i32
    return %arg0, %c0_i32, %arg1 : i32, i32, i32
  }
}

</mosaic_0001>

<llo_original>
// kernel: tpu_custom_call.1
$region0: #{tpu_custom_call.1}
  #allocation0 [shape = 'u32[]', space=smem, size = 0x4, offset = 0x4, fixed_abs, tag = 'smem constant byte address 0x4 - core index']
  #allocation1 [shape = 'u32[144,128]{1,0:T(1,128)}', space=vmem, size = 0x12000, scoped, tag = 'internal scratch']
  %s0 = inlined_call_operand.hbm [shape: s32[2,1,256], index: 0, kind: input, shape index: {}]
  %s1 = inlined_call_operand.hbm [shape: f32[2,4,256], index: 1, kind: input, shape index: {}]
  %s2 = inlined_call_operand.hbm [shape: f32[2,4,256], index: 2, kind: output, shape index: {}]
  %s3 = sld [smem:[#allocation0]]
  $region49: #{tpu_custom_call.1} parent=0
    _
  %s5 = ssub.s32 1, %s3
  %s6 = scalar_select 0, %s5, %s3
  $region1: #{tpu_custom_call.1} parent=0
    #allocation2 [shape = 'u8[2048]{0}', space=vmem, size = 0x800, scoped, tag = 'input window, operand 0']
    #allocation3 [shape = 's32[2]{0}', space=sflag, size = 0x8, scoped, tag = 'scoped memory for tpu_custom_call.1']
    #allocation4 [shape = 's32[2]{0}', space=sflag, size = 0x8, scoped, tag = 'scoped memory for tpu_custom_call.1']
    #allocation5 [shape = 'u8[8192]{0}', space=vmem, size = 0x2000, scoped, tag = 'input window, operand 1']
    #allocation6 [shape = 's32[2]{0}', space=sflag, size = 0x8, scoped, tag = 'scoped memory for tpu_custom_call.1']
    #allocation7 [shape = 'u8[8192]{0}', space=vmem, size = 0x2000, scoped, tag = 'output window, operand 0']
    %7 = vsyncpa [#allocation3], 0
    %s8 = scalar_lea.sflag [#allocation3], 1
    %9 = vsyncpa %s8, 0
    %10 = vsyncpa [#allocation6], 0
    %s11 = scalar_lea.sflag [#allocation6], 1
    %12 = vsyncpa %s11, 0
    %13 = vsyncpa [#allocation4], 0
    %s14 = scalar_lea.sflag [#allocation4], 1
    %15 = vsyncpa %s14, 0
    loop: start=0, step=1, limit=4
    $region2: #{tpu_custom_call.1} parent=1 // loop_pre_header
      _
    $region3: #{tpu_custom_call.1} parent=1 // loop_header
      %s17 = sphi 0, %s21
      %p18 = scmp.ge.s32.totalorder %s17, 4
      %s24 = sphi 0, %s36
      %s25 = sphi 0, %s32
      %s26 = sphi 0, %s24
      %s27 = sphi 0, %s25
      %s28 = sphi 0, %s26
      %s29 = sphi 0, %s27
      %s41 = sphi 0, %s43
      %s44 = sphi 0, %s41
      %s45 = sphi 0, %s44
      %s61 = sphi 0, %s45
      %s69 = sphi 0, %s71
      %s72 = sphi 0, %s69
      %s73 = sphi 0, %s72
      %s89 = sphi 0, %s73
      %s97 = sphi 0, %s99
      %s100 = sphi 0, %s97
      %s101 = sphi 0, %s100
      %s117 = sphi 0, %s101
    $region4: #{tpu_custom_call.1} parent=1 // loop_header_branch
      %20 = sbr.rel (%p18) target = $region8
    $region5: #{tpu_custom_call.1} parent=1 // loop_body
      %s22 = ssub.s32 %s17, 1
      %s23 = ssub.s32 %s17, 2
      %s30 = sadd.s32 1, %s25
      %p31 = scmp.ge.s32.totalorder %s30, 1
      %s32 = scalar_select %p31, 0, %s30
      %s33 = sadd.s32 1, %s24
      %s34 = scalar_select %p31, %s33, %s24
      %p35 = scmp.ge.s32.totalorder %s34, 2
      %s36 = scalar_select %p35, 0, %s34
      %s37 = ssub.s32 %s24, %s36
      %s38 = ssub.s32 %s25, %s32
      %s39 = sor.u32 %s37, %s38
      %p40 = scmp.eq.s32.totalorder %s39, 0
      %s42 = sadd.s32 %s41, 1
      %s43 = scalar_select %p40, %s41, %s42
      %p46 = pneg %p40
      %p47 = scmp.eq.s32.totalorder %s17, 1
      %p48 = por %p46, %p47
      %p49 = scmp.ne.s32.totalorder %s41, %s44
      %p50 = scmp.eq.s32.totalorder %s17, 0
      %p51 = por %p49, %p50
      %p52 = scmp.ne.s32.totalorder %s41, %s44
      %p53 = scmp.eq.s32.totalorder %s22, 1
      %p54 = por %p52, %p53
      %p55 = scmp.ne.s32.totalorder %s44, %s45
      %p56 = scmp.eq.s32.totalorder %s22, 0
      %p57 = por %p55, %p56
      %p58 = scmp.ne.s32.totalorder %s44, %s45
      %p59 = scmp.eq.s32.totalorder %s23, 1
      %p60 = por %p58, %p59
      %p62 = scmp.ne.s32.totalorder %s45, %s61
      %p63 = scmp.eq.s32.totalorder %s23, 0
      %p64 = por %p62, %p63
      %s65 = ssub.s32 %s24, %s36
      %s66 = ssub.s32 %s25, %s32
      %s67 = sor.u32 %s65, %s66
      %p68 = scmp.eq.s32.totalorder %s67, 0
      %s70 = sadd.s32 %s69, 1
      %s71 = scalar_select %p68, %s69, %s70
      %p74 = pneg %p68
      %p75 = scmp.eq.s32.totalorder %s17, 1
      %p76 = por %p74, %p75
      %p77 = scmp.ne.s32.totalorder %s69, %s72
      %p78 = scmp.eq.s32.totalorder %s17, 0
      %p79 = por %p77, %p78
      %p80 = scmp.ne.s32.totalorder %s69, %s72
      %p81 = scmp.eq.s32.totalorder %s22, 1
      %p82 = por %p80, %p81
      %p83 = scmp.ne.s32.totalorder %s72, %s73
      %p84 = scmp.eq.s32.totalorder %s22, 0
      %p85 = por %p83, %p84
      %p86 = scmp.ne.s32.totalorder %s72, %s73
      %p87 = scmp.eq.s32.totalorder %s23, 1
      %p88 = por %p86, %p87
      %p90 = scmp.ne.s32.totalorder %s73, %s89
      %p91 = scmp.eq.s32.totalorder %s23, 0
      %p92 = por %p90, %p91
      %s93 = ssub.s32 %s24, %s36
      %s94 = ssub.s32 %s25, %s32
      %s95 = sor.u32 %s93, %s94
      %p96 = scmp.eq.s32.totalorder %s95, 0
      %s98 = sadd.s32 %s97, 1
      %s99 = scalar_select %p96, %s97, %s98
      %p102 = pneg %p96
      %p103 = scmp.eq.s32.totalorder %s17, 1
      %p104 = por %p102, %p103
      %p105 = scmp.ne.s32.totalorder %s97, %s100
      %p106 = scmp.eq.s32.totalorder %s17, 0
      %p107 = por %p105, %p106
      %p108 = scmp.ne.s32.totalorder %s97, %s100
      %p109 = scmp.eq.s32.totalorder %s22, 1
      %p110 = por %p108, %p109
      %p111 = scmp.ne.s32.totalorder %s100, %s101
      %p112 = scmp.eq.s32.totalorder %s22, 0
      %p113 = por %p111, %p112
      %p114 = scmp.ne.s32.totalorder %s100, %s101
      %p115 = scmp.eq.s32.totalorder %s23, 1
      %p116 = por %p114, %p115
      %p118 = scmp.ne.s32.totalorder %s101, %s117
      %p119 = scmp.eq.s32.totalorder %s23, 0
      %p120 = por %p118, %p119
      %p121 = scmp.le.s32.totalorder 1, %s17
      %p122 = scmp.lt.s32.totalorder %s17, 3
      %p123 = pnand %p121, %p122
      %p124 = pneg %p123
      // Predicated region
      $region9: #{tpu_custom_call.1} parent=5 // pred_check
        _
      $region10: #{tpu_custom_call.1} parent=5 // pred_check_branch
        %126 = sbr.rel (%p123) target = $region12
      $region11: #{tpu_custom_call.1} parent=5 // pred_region
        %s127 = ssub.s32 %s17, 1
      $region12: #{tpu_custom_call.1} parent=5 // pred_fallthru
        _
      %p128 = scmp.lt.s32.totalorder %s17, 2
      // Predicated region
      $region13: #{tpu_custom_call.1} parent=5 // pred_check
        %p129 = pneg %p128
      $region14: #{tpu_custom_call.1} parent=5 // pred_check_branch
        %131 = sbr.rel (%p129) target = $region16
      $region15: #{tpu_custom_call.1} parent=5 // pred_region
        // Predicated region
        $region17: #{tpu_custom_call.1} parent=15 // pred_check
          %p132 = pneg %p51
        $region18: #{tpu_custom_call.1} parent=15 // pred_check_branch
          %134 = sbr.rel (%p132) target = $region20
        $region19: #{tpu_custom_call.1} parent=15 // pred_region
          %s135 = sand.u32 %s41, 1
          %s136 = scalar_lea.sflag [#allocation3], %s135
          %s137 = sand.u32 %s41, 1
          %s138 = smul.addr %s137, 2
          %s139 = scalar_lea.vmem [#allocation2], %s138
          %s140 = smul.u32 2, %s25
          %s142 = ssub.s32 32, 32
          %143 = vsyncadd %s136, %s142
          %s144 = smul.addr %s24, 2
          %s145 = sadd.s32 %s140, %s144
          %s146 = smul.addr %s145, 16
          %s147 = scalar_lea.hbm %s0, %s146
          %s149 = sshll.u32 %s139, 4
          %s150 = int_to_ptr.vmem [resolvable:$true] %s149
          %152 = dma.hbm_to_vmem [thread:$0]  %s147, 32, %s150, %s136
        $region20: #{tpu_custom_call.1} parent=15 // pred_fallthru
          _
        // Predicated region
        $region21: #{tpu_custom_call.1} parent=15 // pred_check
          %p153 = pneg %p79
        $region22: #{tpu_custom_call.1} parent=15 // pred_check_branch
          %155 = sbr.rel (%p153) target = $region24
        $region23: #{tpu_custom_call.1} parent=15 // pred_region
          %s156 = sand.u32 %s69, 1
          %s157 = scalar_lea.sflag [#allocation6], %s156
          %s158 = sand.u32 %s69, 1
          %s159 = smul.addr %s158, 8
          %s160 = scalar_lea.vmem [#allocation5], %s159
          %s161 = smul.u32 2, %s25
          %s163 = ssub.s32 128, 128
          %164 = vsyncadd %s157, %s163
          %s165 = smul.addr %s24, 2
          %s166 = sadd.s32 %s161, %s165
          %s167 = smul.addr %s166, 64
          %s168 = scalar_lea.hbm %s1, %s167
          %s170 = sshll.u32 %s160, 4
          %s171 = int_to_ptr.vmem [resolvable:$true] %s170
          %173 = dma.hbm_to_vmem [thread:$0]  %s168, 128, %s171, %s157
        $region24: #{tpu_custom_call.1} parent=15 // pred_fallthru
          _
      $region16: #{tpu_custom_call.1} parent=5 // pred_fallthru
        _
      %p174 = scmp.le.s32.totalorder 1, %s17
      %p175 = scmp.lt.s32.totalorder %s17, 3
      %p176 = pnand %p174, %p175
      %p177 = pneg %p176
      // Predicated region
      $region25: #{tpu_custom_call.1} parent=5 // pred_check
        _
      $region26: #{tpu_custom_call.1} parent=5 // pred_check_branch
        %179 = sbr.rel (%p176) target = $region28
      $region27: #{tpu_custom_call.1} parent=5 // pred_region
        %s180 = ssub.s32 %s17, 1
        %s181 = sand.u32 %s44, 1
        %s182 = scalar_lea.sflag [#allocation3], %s181
        %s183 = sand.u32 %s44, 1
        %s184 = smul.addr %s183, 2
        %s185 = scalar_lea.vmem [#allocation2], %s184
        // Predicated region
        $region29: #{tpu_custom_call.1} parent=27 // pred_check
          %p186 = pneg %p57
        $region30: #{tpu_custom_call.1} parent=27 // pred_check_branch
          %188 = sbr.rel (%p186) target = $region32
        $region31: #{tpu_custom_call.1} parent=27 // pred_region
          %189 = dma.done %s182, 32
        $region32: #{tpu_custom_call.1} parent=27 // pred_fallthru
          _
        %s190 = sand.u32 %s72, 1
        %s191 = scalar_lea.sflag [#allocation6], %s190
        %s192 = sand.u32 %s72, 1
        %s193 = smul.addr %s192, 8
        %s194 = scalar_lea.vmem [#allocation5], %s193
        // Predicated region
        $region33: #{tpu_custom_call.1} parent=27 // pred_check
          %p195 = pneg %p85
        $region34: #{tpu_custom_call.1} parent=27 // pred_check_branch
          %197 = sbr.rel (%p195) target = $region36
        $region35: #{tpu_custom_call.1} parent=27 // pred_region
          %198 = dma.done %s191, 128
        $region36: #{tpu_custom_call.1} parent=27 // pred_fallthru
          _
        %s199 = sand.u32 %s44, 1
        %s200 = scalar_lea.sflag [#allocation3], %s199
        %s201 = sand.u32 %s44, 1
        %s202 = smul.addr %s201, 2
        %s203 = scalar_lea.vmem [#allocation2], %s202
        %p204 = pneg %p57
        %p205 = pneg %p54
        %s206 = sand.u32 %s72, 1
        %s207 = scalar_lea.sflag [#allocation6], %s206
        %s208 = sand.u32 %s72, 1
        %s209 = smul.addr %s208, 8
        %s210 = scalar_lea.vmem [#allocation5], %s209
        %p211 = pneg %p85
        %p212 = pneg %p82
        %p213 = pneg %p113
        %p214 = pneg %p110
        %s215 = sand.u32 %s100, 1
        %s216 = scalar_lea.sflag [#allocation4], %s215
        %s217 = sand.u32 %s100, 1
        %s218 = smul.addr %s217, 8
        %s219 = scalar_lea.vmem [#allocation7], %s218
        %s220 = smul.u32 2, %s27
        %s221 = smul.u32 2, %s27
        %s222 = smul.u32 2, %s27
        %v223 = vld [vmem:[%s194] sm:$0xff]
        %v224 = vld [vmem:[%s185] sm:$0x3]
        %v225 = vlaneseq
        %v226 = vshrl.u32 %v225, 7
        %v227 = vadd.s32 %v226, 3
        %vm228 = vcmp.ne.s32.totalorder %v227, 0
        %vm229 = vcmp.ne.s32.totalorder %v227, 255
        %vm230 = vmand %vm228, %vm229
        %v231 = vlaneseq
        %v232 = vshrl.u32 %v231, 7
        %v233 = vsub.s32 0, %v232
        %v234 = vrot.slane %v224, %v233
        %v235 = vlaneseq
        %v236 = vshrl.u32 %v235, 7
        %v237 = vsub.s32 1, %v236
        %v238 = vrot.slane %v224, %v237
        %vm239 = vcmp.eq.s32.totalorder %v234, %v227
        %vm240 = vcmp.eq.s32.totalorder %v238, %v227
        %vm241 = vmand %vm230, %vm239
        %vm242 = vmand %vm230, %vm240
        %v243 = vmax.f32 %v223, 0.0
        %v244 = vand.u32 2147483647, %v223
        %v245 = vsub.f32 0.0, %v244
        %v246 = vmul.f32 %v245, 1.442695
        %v247 = vpow.pop %v246
        %v248 = vadd.f32 %v247, 1.0
        %v249 = vlog2.pop %v248
        %v250 = vmul.f32 %v249, 0.6931472
        %v251 = vmul.f32 -0.5, %v247
        %v252 = vadd.f32 %v251, 1.0
        %v253 = vmul.f32 %v252, %v247
        %v254 = vand.u32 2147483647, %v247
        %vm255 = vcmp.lt.f32.partialorder %v254, 0.0004427343
        %v256 = vsel %vm255, %v253, %v250
        %v257 = vadd.f32 %v243, %v256
        %v259 = vcombine.high %v223, %v223
        %v261 = vsel %vm241, %v223, 0.0
        %v262 = vsel %vm242, %v259, 0.0
        %v265 = vcombine.low %v261, %v262
        %v267 = vsub.f32 %v257, %v265
        %268 = vst [vmem:[%s219] sm:$0xff] %v267
        %s269 = sand.u32 %s100, 1
        %s270 = scalar_lea.sflag [#allocation4], %s269
        %s271 = sand.u32 %s100, 1
        %s272 = smul.addr %s271, 8
        %s273 = scalar_lea.vmem [#allocation7], %s272
        // Predicated region
        $region37: #{tpu_custom_call.1} parent=27 // pred_check
          %p274 = pneg %p110
        $region38: #{tpu_custom_call.1} parent=27 // pred_check_branch
          %276 = sbr.rel (%p274) target = $region40
        $region39: #{tpu_custom_call.1} parent=27 // pred_region
          %s277 = smul.u32 2, %s27
          %s279 = ssub.s32 128, 128
          %280 = vsyncadd %s270, %s279
          %s281 = smul.addr %s26, 2
          %s282 = sadd.s32 %s277, %s281
          %s283 = smul.addr %s282, 64
          %s284 = scalar_lea.hbm %s2, %s283
          %s286 = sshll.u32 %s273, 4
          %s287 = int_to_ptr.vmem [resolvable:$true] %s286
          %289 = dma.vmem_to_hbm [thread:$0]  %s287, 128, %s284, %s270
        $region40: #{tpu_custom_call.1} parent=27 // pred_fallthru
          _
      $region28: #{tpu_custom_call.1} parent=5 // pred_fallthru
        _
      %p290 = scmp.le.s32.totalorder 2, %s17
      // Predicated region
      $region41: #{tpu_custom_call.1} parent=5 // pred_check
        %p291 = pneg %p290
      $region42: #{tpu_custom_call.1} parent=5 // pred_check_branch
        %293 = sbr.rel (%p291) target = $region44
      $region43: #{tpu_custom_call.1} parent=5 // pred_region
        %s294 = ssub.s32 %s17, 2
        // Predicated region
        $region45: #{tpu_custom_call.1} parent=43 // pred_check
          %p295 = pneg %p116
        $region46: #{tpu_custom_call.1} parent=43 // pred_check_branch
          %297 = sbr.rel (%p295) target = $region48
        $region47: #{tpu_custom_call.1} parent=43 // pred_region
          %s298 = sand.u32 %s101, 1
          %s299 = scalar_lea.sflag [#allocation4], %s298
          %s300 = sand.u32 %s101, 1
          %s301 = smul.addr %s300, 8
          %s302 = scalar_lea.vmem [#allocation7], %s301
          %303 = dma.done %s299, 128
        $region48: #{tpu_custom_call.1} parent=43 // pred_fallthru
          _
      $region44: #{tpu_custom_call.1} parent=5 // pred_fallthru
        _
    $region6: #{tpu_custom_call.1} parent=1 // loop_footer
      %s21 = sadd.s32 1, %s17
    $region7: #{tpu_custom_call.1} parent=1 // loop_footer_branch
      %16 = sbr.rel target = $region3
    $region8: #{tpu_custom_call.1} parent=1 // loop_exit
      _
    %304 = vsyncpa [#allocation3], 1
    %s305 = scalar_lea.sflag [#allocation3], 1
    %306 = vsyncpa %s305, 1
    %307 = vsyncpa [#allocation6], 1
    %s308 = scalar_lea.sflag [#allocation6], 1
    %309 = vsyncpa %s308, 1
    %310 = vsyncpa [#allocation4], 1
    %s311 = scalar_lea.sflag [#allocation4], 1
    %312 = vsyncpa %s311, 1

</llo_original>
